<compile_context>
chip_gen: v6e
topology: v6e:2x2x1
jax: 0.10.0
libtpu: 0.0.40
codegen_flags: <defaults>
</compile_context>

<pallas_src>
import jax
import jax.numpy as jnp
from jax import lax
from jax.experimental import pallas as pl
from jax.experimental.pallas import tpu as pltpu


def _grad_loss_kernel(x_ref, t_ref, out_ref):
    B, H, W = x_ref.shape
    Ho, Wo = H - 2, W - 2

    d = x_ref[...].astype(jnp.float32) - t_ref[...].astype(jnp.float32)  # (B,H,W)

    # ---- L1 term: sum |x - t| over this block --------------------------------
    l1_hw = jnp.sum(jnp.abs(d), axis=0)                  # (H, W)   VPU adds
    l1_p = jnp.sum(l1_hw, axis=(0, 1), keepdims=True)    # (1, 1)   one small XLU reduce

    # ---- Sobel-gradient term: sobel of the difference, separable form --------
    # grad_x kernel = [1,2,1]^T (rows) x [-1,0,1] (cols)
    sy = d[:, 0:Ho, :] + 2.0 * d[:, 1:Ho + 1, :] + d[:, 2:Ho + 2, :]    # (B,Ho,W)
    gx = jnp.abs(sy[:, :, 2:Wo + 2] - sy[:, :, 0:Wo])                   # (B,Ho,Wo)
    g_hw = jnp.sum(gx, axis=0)                                          # (Ho,Wo)
    # grad_y kernel = [-1,0,1]^T (rows) x [1,2,1] (cols)
    sx = d[:, :, 0:Wo] + 2.0 * d[:, :, 1:Wo + 1] + d[:, :, 2:Wo + 2]    # (B,H,Wo)
    gy = jnp.abs(sx[:, 2:Ho + 2, :] - sx[:, 0:Ho, :])                   # (B,Ho,Wo)
    g_hw = g_hw + jnp.sum(gy, axis=0)                                   # (Ho,Wo)
    g_p = jnp.sum(g_hw, axis=(0, 1), keepdims=True)                     # (1,1)

    # One lane-dense (8, 128) partial-sum tile per grid block:
    #   row 0 -> sum |x - t|, row 1 -> sum |dgx| + |dgy|, rows 2..7 -> 0
    row = lax.broadcasted_iota(jnp.int32, (8, 128), 0)
    out_ref[...] = jnp.where(row == 0, l1_p,
                             jnp.where(row == 1, g_p, jnp.float32(0.0)))


def gradient_loss(inp, tgt, weight=1.0):
    """Pallas implementation of GradientLoss.forward(input, target)."""
    N, C, H, W = inp.shape
    assert H >= 3 and W >= 3, "Sobel VALID conv needs H, W >= 3"
    NC = N * C
    x = inp.reshape(NC, H, W)
    t = tgt.reshape(NC, H, W)

    # Pack planes into blocks: ~1 MiB of input per block (good HBM DMA size,
    # amortizes per-step overhead), keep intermediates well under the 32 MiB
    # scoped-VMEM budget (safe on v5e/v6e/v7x), and keep >= 2 blocks so the
    # "parallel" grid axis can split across v7x's two TensorCores.
    slice_bytes = H * W * x.dtype.itemsize
    target_B = max(1, (1024 * 1024) // slice_bytes)
    B = max(1, min(NC, target_B))
    if NC >= 2:
        B = min(B, pl.cdiv(NC, 2))
    # Prefer a block size that divides NC exactly: avoids an extra full HBM
    # copy of both inputs from jnp.pad.  Fall back to padding otherwise.
    for cand in range(B, max(1, B // 2) - 1, -1):
        if NC % cand == 0:
            B = cand
            break
    n_blocks = pl.cdiv(NC, B)
    NC_pad = n_blocks * B
    if NC_pad != NC:
        # Zero-padded planes contribute exactly 0 to every partial sum.
        pad = ((0, NC_pad - NC), (0, 0), (0, 0))
        x = jnp.pad(x, pad)
        t = jnp.pad(t, pad)

    n_elem = N * C * H * W
    n_grad = N * C * (H - 2) * (W - 2)
    cost = pl.CostEstimate(
        flops=20 * NC_pad * H * W,
        transcendentals=0,
        bytes_accessed=2 * NC_pad * H * W * x.dtype.itemsize
        + n_blocks * 8 * 128 * 4)

    parts = pl.pallas_call(
        _grad_loss_kernel,
        out_shape=jax.ShapeDtypeStruct((n_blocks, 8, 128), jnp.float32),
        grid=(n_blocks,),
        in_specs=[pl.BlockSpec((B, H, W), lambda i: (i, 0, 0)),
                  pl.BlockSpec((B, H, W), lambda i: (i, 0, 0))],
        out_specs=pl.BlockSpec((None, 8, 128), lambda i: (i, 0, 0)),
        compiler_params=pltpu.CompilerParams(
            dimension_semantics=("parallel",),
            vmem_limit_bytes=32 * 1024 * 1024),
        cost_estimate=cost,
    )(x, t)
    # TODO(synk): for very large single planes (H*W*4 >> VMEM budget) add
    # H-tiling with a 2-row halo instead of loading a whole plane per block.

    l1_sum = jnp.sum(parts[:, 0, 0])
    g_sum = jnp.sum(parts[:, 1, 0])
    l1_loss = l1_sum / n_elem
    grad_loss = 0.5 * g_sum / n_grad
    return l1_loss + grad_loss * weight


def reference_loss(inp, tgt, weight=1.0):
    """Pure-JAX reference mirroring the PyTorch module (deterministic buffers)."""
    C = inp.shape[1]
    kx = jnp.array([[-1., 0., 1.], [-2., 0., 2.], [-1., 0., 1.]], jnp.float32)
    ky = jnp.array([[-1., -2., -1.], [0., 0., 0.], [1., 2., 1.]], jnp.float32)
    kx = jnp.tile(kx[None, None], (C, 1, 1, 1))   # (C,1,3,3) depthwise, OIHW
    ky = jnp.tile(ky[None, None], (C, 1, 1, 1))

    def conv(img, k):
        return lax.conv_general_dilated(
            img, k, window_strides=(1, 1), padding='VALID',
            dimension_numbers=('NCHW', 'OIHW', 'NCHW'),
            feature_group_count=C)

    l1 = jnp.mean(jnp.abs(inp - tgt))
    gl = 0.5 * (jnp.mean(jnp.abs(conv(inp, kx) - conv(tgt, kx))) +
                jnp.mean(jnp.abs(conv(inp, ky) - conv(tgt, ky))))
    return l1 + gl * weight


if __name__ == "__main__":
    key = jax.random.PRNGKey(0)
    k1, k2 = jax.random.split(key)
    N, C, H, W = 2, 3, 16, 16   # module registers 3-channel depthwise Sobel buffers
    inp = jax.random.normal(k1, (N, C, H, W), dtype=jnp.float32)
    tgt = jax.random.normal(k2, (N, C, H, W), dtype=jnp.float32)

    out = gradient_loss(inp, tgt, weight=1.0)
    out = jax.block_until_ready(out)

    ref = reference_loss(inp, tgt, weight=1.0)
    assert jnp.allclose(out, ref, rtol=1e-5, atol=1e-5), (float(out), float(ref))
    print("KERNEL_OK")
</pallas_src>

<mosaic_0001>
module attributes {stable_mosaic.version = 11 : i64} {
  func.func @_grad_loss_kernel(%arg0: i32, %arg1: memref<3x16x16xf32, #tpu.memory_space<vmem>>, %arg2: memref<3x16x16xf32, #tpu.memory_space<vmem>>, %arg3: memref<1x8x128xf32, #tpu.memory_space<vmem>>) attributes {dimension_semantics = [#tpu.dimension_semantics<parallel>], iteration_bounds = array<i64: 2>, scalar_prefetch = 0 : i64, scratch_operands = 0 : i64, tpu.core_type = #tpu.core_type<tc>, window_params = [{transform_indices = @transform_0, window_bounds = array<i64: 3, 16, 16>}, {transform_indices = @transform_1, window_bounds = array<i64: 3, 16, 16>}, {transform_indices = @transform_2, window_bounds = array<i64: 1, 8, 128>}]} {
    %c0 = arith.constant 0 : index
    %c0_0 = arith.constant 0 : index
    %c0_1 = arith.constant 0 : index
    %0 = vector.load %arg1[%c0, %c0_0, %c0_1] : memref<3x16x16xf32, #tpu.memory_space<vmem>>, vector<3x16x16xf32>
    %c0_2 = arith.constant 0 : index
    %c0_3 = arith.constant 0 : index
    %c0_4 = arith.constant 0 : index
    %1 = vector.load %arg2[%c0_2, %c0_3, %c0_4] : memref<3x16x16xf32, #tpu.memory_space<vmem>>, vector<3x16x16xf32>
    %2 = arith.subf %0, %1 : vector<3x16x16xf32>
    %3 = math.absf %2 : vector<3x16x16xf32>
    %cst = arith.constant dense<0.000000e+00> : vector<16x16xf32>
    %4 = vector.multi_reduction <add>, %3, %cst [0] : vector<3x16x16xf32> to vector<16x16xf32>
    %5 = vector.shape_cast %4 : vector<16x16xf32> to vector<1x16x16xf32>
    %cst_5 = arith.constant dense<0.000000e+00> : vector<1xf32>
    %6 = vector.multi_reduction <add>, %5, %cst_5 [1, 2] : vector<1x16x16xf32> to vector<1xf32>
    %7 = vector.shape_cast %6 : vector<1xf32> to vector<1x1x1xf32>
    %8 = vector.extract %7[0, 0, 0] : f32 from vector<1x1x1xf32>
    %9 = vector.broadcast %8 : f32 to vector<1x1xf32>
    %10 = vector.extract_strided_slice %2 {offsets = [0, 0, 0], sizes = [3, 14, 16], strides = [1, 1, 1]} : vector<3x16x16xf32> to vector<3x14x16xf32>
    %11 = vector.extract_strided_slice %2 {offsets = [0, 1, 0], sizes = [3, 14, 16], strides = [1, 1, 1]} : vector<3x16x16xf32> to vector<3x14x16xf32>
    %cst_6 = arith.constant 2.000000e+00 : f32
    %12 = vector.broadcast %cst_6 : f32 to vector<3x14x16xf32>
    %13 = arith.mulf %12, %11 : vector<3x14x16xf32>
    %14 = arith.addf %10, %13 : vector<3x14x16xf32>
    %15 = vector.extract_strided_slice %2 {offsets = [0, 2, 0], sizes = [3, 14, 16], strides = [1, 1, 1]} : vector<3x16x16xf32> to vector<3x14x16xf32>
    %16 = arith.addf %14, %15 : vector<3x14x16xf32>
    %17 = vector.extract_strided_slice %16 {offsets = [0, 0, 2], sizes = [3, 14, 14], strides = [1, 1, 1]} : vector<3x14x16xf32> to vector<3x14x14xf32>
    %18 = vector.extract_strided_slice %16 {offsets = [0, 0, 0], sizes = [3, 14, 14], strides = [1, 1, 1]} : vector<3x14x16xf32> to vector<3x14x14xf32>
    %19 = arith.subf %17, %18 : vector<3x14x14xf32>
    %20 = math.absf %19 : vector<3x14x14xf32>
    %cst_7 = arith.constant dense<0.000000e+00> : vector<14x14xf32>
    %21 = vector.multi_reduction <add>, %20, %cst_7 [0] : vector<3x14x14xf32> to vector<14x14xf32>
    %22 = vector.extract_strided_slice %2 {offsets = [0, 0, 0], sizes = [3, 16, 14], strides = [1, 1, 1]} : vector<3x16x16xf32> to vector<3x16x14xf32>
    %23 = vector.extract_strided_slice %2 {offsets = [0, 0, 1], sizes = [3, 16, 14], strides = [1, 1, 1]} : vector<3x16x16xf32> to vector<3x16x14xf32>
    %cst_8 = arith.constant 2.000000e+00 : f32
    %24 = vector.broadcast %cst_8 : f32 to vector<3x16x14xf32>
    %25 = arith.mulf %24, %23 : vector<3x16x14xf32>
    %26 = arith.addf %22, %25 : vector<3x16x14xf32>
    %27 = vector.extract_strided_slice %2 {offsets = [0, 0, 2], sizes = [3, 16, 14], strides = [1, 1, 1]} : vector<3x16x16xf32> to vector<3x16x14xf32>
    %28 = arith.addf %26, %27 : vector<3x16x14xf32>
    %29 = vector.extract_strided_slice %28 {offsets = [0, 2, 0], sizes = [3, 14, 14], strides = [1, 1, 1]} : vector<3x16x14xf32> to vector<3x14x14xf32>
    %30 = vector.extract_strided_slice %28 {offsets = [0, 0, 0], sizes = [3, 14, 14], strides = [1, 1, 1]} : vector<3x16x14xf32> to vector<3x14x14xf32>
    %31 = arith.subf %29, %30 : vector<3x14x14xf32>
    %32 = math.absf %31 : vector<3x14x14xf32>
    %cst_9 = arith.constant dense<0.000000e+00> : vector<14x14xf32>
    %33 = vector.multi_reduction <add>, %32, %cst_9 [0] : vector<3x14x14xf32> to vector<14x14xf32>
    %34 = arith.addf %21, %33 : vector<14x14xf32>
    %35 = vector.shape_cast %34 : vector<14x14xf32> to vector<1x14x14xf32>
    %cst_10 = arith.constant dense<0.000000e+00> : vector<1xf32>
    %36 = vector.multi_reduction <add>, %35, %cst_10 [1, 2] : vector<1x14x14xf32> to vector<1xf32>
    %37 = vector.shape_cast %36 : vector<1xf32> to vector<1x1x1xf32>
    %38 = vector.extract %37[0, 0, 0] : f32 from vector<1x1x1xf32>
    %39 = vector.broadcast %38 : f32 to vector<1x1xf32>
    %40 = tpu.iota {dimensions = array<i32: 0>} : vector<8x128xi32>
    %c0_i32 = arith.constant 0 : i32
    %41 = vector.broadcast %c0_i32 : i32 to vector<8x128xi32>
    %42 = arith.cmpi eq, %40, %41 : vector<8x128xi32>
    %c1_i32 = arith.constant 1 : i32
    %43 = vector.broadcast %c1_i32 : i32 to vector<8x128xi32>
    %44 = arith.cmpi eq, %40, %43 : vector<8x128xi32>
    %cst_11 = arith.constant 0.000000e+00 : f32
    %45 = vector.shape_cast %39 : vector<1x1xf32> to vector<1x1xf32>
    %46 = vector.broadcast %45 : vector<1x1xf32> to vector<8x128xf32>
    %47 = vector.broadcast %cst_11 : f32 to vector<8x128xf32>
    %48 = arith.select %44, %46, %47 : vector<8x128xi1>, vector<8x128xf32>
    %49 = vector.shape_cast %9 : vector<1x1xf32> to vector<1x1xf32>
    %50 = vector.broadcast %49 : vector<1x1xf32> to vector<8x128xf32>
    %51 = arith.select %42, %50, %48 : vector<8x128xi1>, vector<8x128xf32>
    %c0_12 = arith.constant 0 : index
    %c0_13 = arith.constant 0 : index
    %c0_14 = arith.constant 0 : index
    %52 = vector.load %arg3[%c0_12, %c0_13, %c0_14] : memref<1x8x128xf32, #tpu.memory_space<vmem>>, vector<1x8x128xf32>
    %53 = vector.shape_cast %52 : vector<1x8x128xf32> to vector<8x128xf32>
    %54 = vector.shape_cast %51 : vector<8x128xf32> to vector<1x8x128xf32>
    tpu.vector_store %arg3[%c0_12, %c0_13, %c0_14], %54 {strides = array<i32>} : memref<1x8x128xf32, #tpu.memory_space<vmem>>, vector<1x8x128xf32>,
    return
  }
  func.func @transform_0(%arg0: i32) -> (i32, i32, i32) {
    %c0_i32 = arith.constant 0 : i32
    %c0_i32_0 = arith.constant 0 : i32
    %c0_i32_1 = arith.constant 0 : i32
    return %arg0, %c0_i32, %c0_i32_0 : i32, i32, i32
  }
  func.func @transform_1(%arg0: i32) -> (i32, i32, i32) {
    %c0_i32 = arith.constant 0 : i32
    %c0_i32_0 = arith.constant 0 : i32
    %c0_i32_1 = arith.constant 0 : i32
    return %arg0, %c0_i32, %c0_i32_0 : i32, i32, i32
  }
  func.func @transform_2(%arg0: i32) -> (i32, i32, i32) {
    %c0_i32 = arith.constant 0 : i32
    %c0_i32_0 = arith.constant 0 : i32
    %c0_i32_1 = arith.constant 0 : i32
    return %arg0, %c0_i32, %c0_i32_0 : i32, i32, i32
  }
}

</mosaic_0001>

<llo_original>
// kernel: tpu_custom_call.1
$region0: #{tpu_custom_call.1}
  #allocation0 [shape = 'u32[]', space=smem, size = 0x4, offset = 0x4, fixed_abs, tag = 'smem constant byte address 0x4 - core index']
  #allocation1 [shape = 'u32[144,128]{1,0:T(1,128)}', space=vmem, size = 0x12000, scoped, tag = 'internal scratch']
  %s0 = inlined_call_operand.hbm [shape: f32[6,16,16], index: 0, kind: input, shape index: {}]
  %s1 = inlined_call_operand.hbm [shape: f32[6,16,16], index: 1, kind: input, shape index: {}]
  %s2 = inlined_call_operand.hbm [shape: f32[2,8,128], index: 2, kind: output, shape index: {}]
  %s3 = sld [smem:[#allocation0]]
  $region49: #{tpu_custom_call.1} parent=0
    _
  %s5 = ssub.s32 1, %s3
  %s6 = scalar_select 0, %s5, %s3
  $region1: #{tpu_custom_call.1} parent=0
    #allocation2 [shape = 'u8[49152]{0}', space=vmem, size = 0xc000, scoped, tag = 'input window, operand 0']
    #allocation3 [shape = 's32[2]{0}', space=sflag, size = 0x8, scoped, tag = 'scoped memory for tpu_custom_call.1']
    #allocation4 [shape = 's32[2]{0}', space=sflag, size = 0x8, scoped, tag = 'scoped memory for tpu_custom_call.1']
    #allocation5 [shape = 'u8[49152]{0}', space=vmem, size = 0xc000, scoped, tag = 'input window, operand 1']
    #allocation6 [shape = 's32[2]{0}', space=sflag, size = 0x8, scoped, tag = 'scoped memory for tpu_custom_call.1']
    #allocation7 [shape = 'u8[8192]{0}', space=vmem, size = 0x2000, scoped, tag = 'output window, operand 0']
    %7 = vsyncpa [#allocation3], 0
    %s8 = scalar_lea.sflag [#allocation3], 1
    %9 = vsyncpa %s8, 0
    %10 = vsyncpa [#allocation6], 0
    %s11 = scalar_lea.sflag [#allocation6], 1
    %12 = vsyncpa %s11, 0
    %13 = vsyncpa [#allocation4], 0
    %s14 = scalar_lea.sflag [#allocation4], 1
    %15 = vsyncpa %s14, 0
    loop: start=0, step=1, limit=4
    $region2: #{tpu_custom_call.1} parent=1 // loop_pre_header
      _
    $region3: #{tpu_custom_call.1} parent=1 // loop_header
      %s17 = sphi 0, %s21
      %p18 = scmp.ge.s32.totalorder %s17, 4
      %s27 = sphi 0, %s29
      %s30 = sphi 0, %s27
      %s31 = sphi 0, %s30
      %s47 = sphi 0, %s31
      %s53 = sphi 0, %s55
      %s56 = sphi 0, %s53
      %s57 = sphi 0, %s56
      %s73 = sphi 0, %s57
      %s79 = sphi 0, %s81
      %s82 = sphi 0, %s79
      %s83 = sphi 0, %s82
      %s99 = sphi 0, %s83
    $region4: #{tpu_custom_call.1} parent=1 // loop_header_branch
      %20 = sbr.rel (%p18) target = $region8
    $region5: #{tpu_custom_call.1} parent=1 // loop_body
      %s22 = ssub.s32 %s17, 1
      %s23 = ssub.s32 %s17, 2
      %s24 = sadd.s32 %s17, 1
      %s25 = ssub.s32 %s17, %s24
      %p26 = scmp.eq.s32.totalorder %s25, 0
      %s28 = sadd.s32 %s27, 1
      %s29 = scalar_select %p26, %s27, %s28
      %p32 = pneg %p26
      %p33 = scmp.eq.s32.totalorder %s17, 1
      %p34 = por %p32, %p33
      %p35 = scmp.ne.s32.totalorder %s27, %s30
      %p36 = scmp.eq.s32.totalorder %s17, 0
      %p37 = por %p35, %p36
      %p38 = scmp.ne.s32.totalorder %s27, %s30
      %p39 = scmp.eq.s32.totalorder %s22, 1
      %p40 = por %p38, %p39
      %p41 = scmp.ne.s32.totalorder %s30, %s31
      %p42 = scmp.eq.s32.totalorder %s22, 0
      %p43 = por %p41, %p42
      %p44 = scmp.ne.s32.totalorder %s30, %s31
      %p45 = scmp.eq.s32.totalorder %s23, 1
      %p46 = por %p44, %p45
      %p48 = scmp.ne.s32.totalorder %s31, %s47
      %p49 = scmp.eq.s32.totalorder %s23, 0
      %p50 = por %p48, %p49
      %s51 = ssub.s32 %s17, %s24
      %p52 = scmp.eq.s32.totalorder %s51, 0
      %s54 = sadd.s32 %s53, 1
      %s55 = scalar_select %p52, %s53, %s54
      %p58 = pneg %p52
      %p59 = scmp.eq.s32.totalorder %s17, 1
      %p60 = por %p58, %p59
      %p61 = scmp.ne.s32.totalorder %s53, %s56
      %p62 = scmp.eq.s32.totalorder %s17, 0
      %p63 = por %p61, %p62
      %p64 = scmp.ne.s32.totalorder %s53, %s56
      %p65 = scmp.eq.s32.totalorder %s22, 1
      %p66 = por %p64, %p65
      %p67 = scmp.ne.s32.totalorder %s56, %s57
      %p68 = scmp.eq.s32.totalorder %s22, 0
      %p69 = por %p67, %p68
      %p70 = scmp.ne.s32.totalorder %s56, %s57
      %p71 = scmp.eq.s32.totalorder %s23, 1
      %p72 = por %p70, %p71
      %p74 = scmp.ne.s32.totalorder %s57, %s73
      %p75 = scmp.eq.s32.totalorder %s23, 0
      %p76 = por %p74, %p75
      %s77 = ssub.s32 %s17, %s24
      %p78 = scmp.eq.s32.totalorder %s77, 0
      %s80 = sadd.s32 %s79, 1
      %s81 = scalar_select %p78, %s79, %s80
      %p84 = pneg %p78
      %p85 = scmp.eq.s32.totalorder %s17, 1
      %p86 = por %p84, %p85
      %p87 = scmp.ne.s32.totalorder %s79, %s82
      %p88 = scmp.eq.s32.totalorder %s17, 0
      %p89 = por %p87, %p88
      %p90 = scmp.ne.s32.totalorder %s79, %s82
      %p91 = scmp.eq.s32.totalorder %s22, 1
      %p92 = por %p90, %p91
      %p93 = scmp.ne.s32.totalorder %s82, %s83
      %p94 = scmp.eq.s32.totalorder %s22, 0
      %p95 = por %p93, %p94
      %p96 = scmp.ne.s32.totalorder %s82, %s83
      %p97 = scmp.eq.s32.totalorder %s23, 1
      %p98 = por %p96, %p97
      %p100 = scmp.ne.s32.totalorder %s83, %s99
      %p101 = scmp.eq.s32.totalorder %s23, 0
      %p102 = por %p100, %p101
      %p103 = scmp.le.s32.totalorder 1, %s17
      %p104 = scmp.lt.s32.totalorder %s17, 3
      %p105 = pnand %p103, %p104
      %p106 = pneg %p105
      // Predicated region
      $region9: #{tpu_custom_call.1} parent=5 // pred_check
        _
      $region10: #{tpu_custom_call.1} parent=5 // pred_check_branch
        %108 = sbr.rel (%p105) target = $region12
      $region11: #{tpu_custom_call.1} parent=5 // pred_region
        %s109 = ssub.s32 %s17, 1
      $region12: #{tpu_custom_call.1} parent=5 // pred_fallthru
        _
      %p110 = scmp.lt.s32.totalorder %s17, 2
      // Predicated region
      $region13: #{tpu_custom_call.1} parent=5 // pred_check
        %p111 = pneg %p110
      $region14: #{tpu_custom_call.1} parent=5 // pred_check_branch
        %113 = sbr.rel (%p111) target = $region16
      $region15: #{tpu_custom_call.1} parent=5 // pred_region
        // Predicated region
        $region17: #{tpu_custom_call.1} parent=15 // pred_check
          %p114 = pneg %p37
        $region18: #{tpu_custom_call.1} parent=15 // pred_check_branch
          %116 = sbr.rel (%p114) target = $region20
        $region19: #{tpu_custom_call.1} parent=15 // pred_region
          %s117 = sand.u32 %s27, 1
          %s118 = scalar_lea.sflag [#allocation3], %s117
          %s119 = sand.u32 %s27, 1
          %s120 = smul.addr %s119, 48
          %s121 = scalar_lea.vmem [#allocation2], %s120
          %s122 = smul.u32 3, %s17
          %s124 = ssub.s32 768, 768
          %125 = vsyncadd %s118, %s124
          %s126 = smul.addr %s122, 2
          %s127 = smul.addr %s126, 128
          %s128 = scalar_lea.hbm %s0, %s127
          %s129 = sshll.u32 %s121, 4
          %s130 = int_to_ptr.vmem [resolvable:$true] %s129
          %135 = dma.hbm_to_vmem [thread:$0]  %s128, 768, %s130, %s118, 128, 128, 8
        $region20: #{tpu_custom_call.1} parent=15 // pred_fallthru
          _
        // Predicated region
        $region21: #{tpu_custom_call.1} parent=15 // pred_check
          %p136 = pneg %p63
        $region22: #{tpu_custom_call.1} parent=15 // pred_check_branch
          %138 = sbr.rel (%p136) target = $region24
        $region23: #{tpu_custom_call.1} parent=15 // pred_region
          %s139 = sand.u32 %s53, 1
          %s140 = scalar_lea.sflag [#allocation6], %s139
          %s141 = sand.u32 %s53, 1
          %s142 = smul.addr %s141, 48
          %s143 = scalar_lea.vmem [#allocation5], %s142
          %s144 = smul.u32 3, %s17
          %s146 = ssub.s32 768, 768
          %147 = vsyncadd %s140, %s146
          %s148 = smul.addr %s144, 2
          %s149 = smul.addr %s148, 128
          %s150 = scalar_lea.hbm %s1, %s149
          %s151 = sshll.u32 %s143, 4
          %s152 = int_to_ptr.vmem [resolvable:$true] %s151
          %157 = dma.hbm_to_vmem [thread:$0]  %s150, 768, %s152, %s140, 128, 128, 8
        $region24: #{tpu_custom_call.1} parent=15 // pred_fallthru
          _
      $region16: #{tpu_custom_call.1} parent=5 // pred_fallthru
        _
      %p158 = scmp.le.s32.totalorder 1, %s17
      %p159 = scmp.lt.s32.totalorder %s17, 3
      %p160 = pnand %p158, %p159
      %p161 = pneg %p160
      // Predicated region
      $region25: #{tpu_custom_call.1} parent=5 // pred_check
        _
      $region26: #{tpu_custom_call.1} parent=5 // pred_check_branch
        %163 = sbr.rel (%p160) target = $region28
      $region27: #{tpu_custom_call.1} parent=5 // pred_region
        %s164 = ssub.s32 %s17, 1
        %s165 = sand.u32 %s30, 1
        %s166 = scalar_lea.sflag [#allocation3], %s165
        %s167 = sand.u32 %s30, 1
        %s168 = smul.addr %s167, 48
        %s169 = scalar_lea.vmem [#allocation2], %s168
        // Predicated region
        $region29: #{tpu_custom_call.1} parent=27 // pred_check
          %p170 = pneg %p43
        $region30: #{tpu_custom_call.1} parent=27 // pred_check_branch
          %172 = sbr.rel (%p170) target = $region32
        $region31: #{tpu_custom_call.1} parent=27 // pred_region
          %173 = dma.done %s166, 768
        $region32: #{tpu_custom_call.1} parent=27 // pred_fallthru
          _
        %s174 = sand.u32 %s56, 1
        %s175 = scalar_lea.sflag [#allocation6], %s174
        %s176 = sand.u32 %s56, 1
        %s177 = smul.addr %s176, 48
        %s178 = scalar_lea.vmem [#allocation5], %s177
        // Predicated region
        $region33: #{tpu_custom_call.1} parent=27 // pred_check
          %p179 = pneg %p69
        $region34: #{tpu_custom_call.1} parent=27 // pred_check_branch
          %181 = sbr.rel (%p179) target = $region36
        $region35: #{tpu_custom_call.1} parent=27 // pred_region
          %182 = dma.done %s175, 768
        $region36: #{tpu_custom_call.1} parent=27 // pred_fallthru
          _
        %s183 = sand.u32 %s30, 1
        %s184 = scalar_lea.sflag [#allocation3], %s183
        %s185 = sand.u32 %s30, 1
        %s186 = smul.addr %s185, 48
        %s187 = scalar_lea.vmem [#allocation2], %s186
        %p188 = pneg %p43
        %p189 = pneg %p40
        %s190 = sand.u32 %s56, 1
        %s191 = scalar_lea.sflag [#allocation6], %s190
        %s192 = sand.u32 %s56, 1
        %s193 = smul.addr %s192, 48
        %s194 = scalar_lea.vmem [#allocation5], %s193
        %p195 = pneg %p69
        %p196 = pneg %p66
        %p197 = pneg %p95
        %p198 = pneg %p92
        %s199 = sand.u32 %s82, 1
        %s200 = scalar_lea.sflag [#allocation4], %s199
        %s201 = sand.u32 %s82, 1
        %s202 = smul.addr %s201, 8
        %s203 = scalar_lea.vmem [#allocation7], %s202
        %s204 = smul.u32 3, %s22
        %s205 = smul.u32 3, %s22
        %v206 = vld [vmem:[%s169] sm:$0xff]
        %v207 = vld [vmem:[%s169 + $0x8] sm:$0xff]
        %v208 = vld [vmem:[%s169 + $0x10] sm:$0xff]
        %v209 = vld [vmem:[%s169 + $0x18] sm:$0xff]
        %v210 = vld [vmem:[%s169 + $0x20] sm:$0xff]
        %v211 = vld [vmem:[%s169 + $0x28] sm:$0xff]
        %v212 = vld [vmem:[%s178] sm:$0xff]
        %v213 = vld [vmem:[%s178 + $0x8] sm:$0xff]
        %v214 = vld [vmem:[%s178 + $0x10] sm:$0xff]
        %v215 = vld [vmem:[%s178 + $0x18] sm:$0xff]
        %v216 = vld [vmem:[%s178 + $0x20] sm:$0xff]
        %v217 = vld [vmem:[%s178 + $0x28] sm:$0xff]
        %v218 = vsub.f32 %v206, %v212
        %v219 = vsub.f32 %v207, %v213
        %v220 = vsub.f32 %v208, %v214
        %v221 = vsub.f32 %v209, %v215
        %v222 = vsub.f32 %v210, %v216
        %v223 = vsub.f32 %v211, %v217
        %v224 = vand.u32 2147483647, %v218
        %v225 = vand.u32 2147483647, %v219
        %v226 = vand.u32 2147483647, %v220
        %v227 = vand.u32 2147483647, %v221
        %v228 = vand.u32 2147483647, %v222
        %v229 = vand.u32 2147483647, %v223
        %vm230 = vcmask 130048
        %v231 = vsel %vm230, %v224, 0.0
        %v232 = vsel %vm230, %v226, 0.0
        %v233 = vadd.f32 %v231, %v232
        %v234 = vsel %vm230, %v228, 0.0
        %v235 = vadd.f32 %v233, %v234
        %v236 = vsel %vm230, %v225, 0.0
        %v237 = vsel %vm230, %v227, 0.0
        %v238 = vadd.f32 %v236, %v237
        %v239 = vsel %vm230, %v229, 0.0
        %v240 = vadd.f32 %v238, %v239
        %v241 = vsel %vm230, %v235, 0.0
        %v242 = vsel %vm230, %v240, 0.0
        %v243 = vadd.f32 %v241, %v242
        %244 = vadd.xlane.f32.xlu0 %v243
        %v245 = vpop.xlane.xlu0 %244
        %v246 = vrot.slane %v245, 4
        %v247 = vadd.f32 %v245, %v246
        %v248 = vrot.slane %v247, 2
        %v249 = vadd.f32 %v247, %v248
        %v250 = vrot.slane %v249, 1
        %v251 = vadd.f32 %v249, %v250
        %s252 = vtos %v251
        %v253 = vmul.f32 %v218, 2.0
        %v254 = vmul.f32 %v219, 2.0
        %v255 = vmul.f32 %v220, 2.0
        %v256 = vmul.f32 %v221, 2.0
        %v257 = vmul.f32 %v222, 2.0
        %v258 = vmul.f32 %v223, 2.0
        %vm265 = vcmask 1046528
        %v266 = vrot.slane %v253, 1
        %v267 = vrot.slane %v254, 1
        %v268 = vsel %vm265, %v266, %v267
        %v269 = vrot.slane %v255, 1
        %v270 = vrot.slane %v256, 1
        %v271 = vsel %vm265, %v269, %v270
        %v272 = vrot.slane %v257, 1
        %v273 = vrot.slane %v258, 1
        %v274 = vsel %vm265, %v272, %v273
        %v281 = vadd.f32 %v218, %v268
        %v282 = vadd.f32 %v219, %v267
        %v283 = vadd.f32 %v220, %v271
        %v284 = vadd.f32 %v221, %v270
        %v285 = vadd.f32 %v222, %v274
        %v286 = vadd.f32 %v223, %v273
        %vm293 = vcmask 1045504
        %v294 = vrot.slane %v218, 2
        %v295 = vrot.slane %v219, 2
        %v296 = vsel %vm293, %v294, %v295
        %v297 = vrot.slane %v220, 2
        %v298 = vrot.slane %v221, 2
        %v299 = vsel %vm293, %v297, %v298
        %v300 = vrot.slane %v222, 2
        %v301 = vrot.slane %v223, 2
        %v302 = vsel %vm293, %v300, %v301
        %v309 = vadd.f32 %v281, %v296
        %v310 = vadd.f32 %v282, %v295
        %v311 = vadd.f32 %v283, %v299
        %v312 = vadd.f32 %v284, %v298
        %v313 = vadd.f32 %v285, %v302
        %v314 = vadd.f32 %v286, %v301
        %321 = vrot.lane.b32.xlu0 %v309, 2
        %v322 = vpop.permute.xlu0 %321
        %323 = vrot.lane.b32.xlu0 %v310, 2
        %v324 = vpop.permute.xlu0 %323
        %325 = vrot.lane.b32.xlu0 %v311, 2
        %v326 = vpop.permute.xlu0 %325
        %327 = vrot.lane.b32.xlu0 %v312, 2
        %v328 = vpop.permute.xlu0 %327
        %329 = vrot.lane.b32.xlu0 %v313, 2
        %v330 = vpop.permute.xlu0 %329
        %331 = vrot.lane.b32.xlu0 %v314, 2
        %v332 = vpop.permute.xlu0 %331
        %v339 = vsub.f32 %v309, %v322
        %v340 = vsub.f32 %v310, %v324
        %v341 = vsub.f32 %v311, %v326
        %v342 = vsub.f32 %v312, %v328
        %v343 = vsub.f32 %v313, %v330
        %v344 = vsub.f32 %v314, %v332
        %v345 = vand.u32 2147483647, %v339
        %v346 = vand.u32 2147483647, %v340
        %v347 = vand.u32 2147483647, %v341
        %v348 = vand.u32 2147483647, %v342
        %v349 = vand.u32 2147483647, %v343
        %v350 = vand.u32 2147483647, %v344
        %vm351 = vcmask 130064
        %v352 = vsel %vm351, %v345, 0.0
        %v353 = vsel %vm351, %v347, 0.0
        %v354 = vadd.f32 %v352, %v353
        %v355 = vsel %vm351, %v349, 0.0
        %v356 = vadd.f32 %v354, %v355
        %vm357 = vcmask 128016
        %v358 = vsel %vm357, %v346, 0.0
        %v359 = vsel %vm357, %v348, 0.0
        %v360 = vadd.f32 %v358, %v359
        %v361 = vsel %vm357, %v350, 0.0
        %v362 = vadd.f32 %v360, %v361
        %363 = vrot.lane.b32.xlu0 %v253, 127
        %v364 = vpop.permute.xlu0 %363
        %365 = vrot.lane.b32.xlu0 %v254, 127
        %v366 = vpop.permute.xlu0 %365
        %367 = vrot.lane.b32.xlu0 %v255, 127
        %v368 = vpop.permute.xlu0 %367
        %369 = vrot.lane.b32.xlu0 %v256, 127
        %v370 = vpop.permute.xlu0 %369
        %371 = vrot.lane.b32.xlu0 %v257, 127
        %v372 = vpop.permute.xlu0 %371
        %373 = vrot.lane.b32.xlu0 %v258, 127
        %v374 = vpop.permute.xlu0 %373
        %v381 = vadd.f32 %v218, %v364
        %v382 = vadd.f32 %v219, %v366
        %v383 = vadd.f32 %v220, %v368
        %v384 = vadd.f32 %v221, %v370
        %v385 = vadd.f32 %v222, %v372
        %v386 = vadd.f32 %v223, %v374
        %387 = vrot.lane.b32.xlu0 %v218, 126
        %v388 = vpop.permute.xlu0 %387
        %389 = vrot.lane.b32.xlu0 %v219, 126
        %v390 = vpop.permute.xlu0 %389
        %391 = vrot.lane.b32.xlu0 %v220, 126
        %v392 = vpop.permute.xlu0 %391
        %393 = vrot.lane.b32.xlu0 %v221, 126
        %v394 = vpop.permute.xlu0 %393
        %395 = vrot.lane.b32.xlu0 %v222, 126
        %v396 = vpop.permute.xlu0 %395
        %397 = vrot.lane.b32.xlu0 %v223, 126
        %v398 = vpop.permute.xlu0 %397
        %v405 = vadd.f32 %v381, %v388
        %v406 = vadd.f32 %v382, %v390
        %v407 = vadd.f32 %v383, %v392
        %v408 = vadd.f32 %v384, %v394
        %v409 = vadd.f32 %v385, %v396
        %v410 = vadd.f32 %v386, %v398
        %vm417 = vcmask 1041408
        %v418 = vrot.slane %v405, 6
        %v419 = vrot.slane %v406, 6
        %v420 = vsel %vm417, %v418, %v419
        %v421 = vrot.slane %v407, 6
        %v422 = vrot.slane %v408, 6
        %v423 = vsel %vm417, %v421, %v422
        %v424 = vrot.slane %v409, 6
        %v425 = vrot.slane %v410, 6
        %v426 = vsel %vm417, %v424, %v425
        %v433 = vsub.f32 %v405, %v418
        %v434 = vsub.f32 %v406, %v420
        %v435 = vsub.f32 %v407, %v421
        %v436 = vsub.f32 %v408, %v423
        %v437 = vsub.f32 %v409, %v424
        %v438 = vsub.f32 %v410, %v426
        %v439 = vand.u32 2147483647, %v433
        %v440 = vand.u32 2147483647, %v434
        %v441 = vand.u32 2147483647, %v435
        %v442 = vand.u32 2147483647, %v436
        %v443 = vand.u32 2147483647, %v437
        %v444 = vand.u32 2147483647, %v438
        %vm445 = vcmask 113666
        %v446 = vsel %vm445, %v439, 0.0
        %v447 = vsel %vm445, %v441, 0.0
        %v448 = vadd.f32 %v446, %v447
        %v449 = vsel %vm445, %v443, 0.0
        %v450 = vadd.f32 %v448, %v449
        %vm451 = vcmask 113664
        %v452 = vsel %vm451, %v440, 0.0
        %v453 = vsel %vm451, %v442, 0.0
        %v454 = vadd.f32 %v452, %v453
        %v455 = vsel %vm451, %v444, 0.0
        %v456 = vadd.f32 %v454, %v455
        %v459 = vrot.slane %v450, 2
        %v460 = vrot.slane %v456, 2
        %v461 = vsel %vm293, %v459, %v460
        %462 = vrot.lane.b32.xlu0 %v461, 2
        %v463 = vpop.permute.xlu0 %462
        %464 = vrot.lane.b32.xlu0 %v460, 2
        %v465 = vpop.permute.xlu0 %464
        %v468 = vadd.f32 %v356, %v463
        %v469 = vadd.f32 %v362, %v465
        %472 = vrot.lane.b32.xlu0 %v468, 126
        %v473 = vpop.permute.xlu0 %472
        %474 = vrot.lane.b32.xlu0 %v469, 126
        %v475 = vpop.permute.xlu0 %474
        %v478 = vsel %vm451, %v473, 0.0
        %vm479 = vcmask 111616
        %v480 = vsel %vm479, %v475, 0.0
        %v481 = vadd.f32 %v478, %v480
        %482 = vadd.xlane.f32.xlu0 %v481
        %v483 = vpop.xlane.xlu0 %482
        %v484 = vrot.slane %v483, 4
        %v485 = vadd.f32 %v483, %v484
        %v486 = vrot.slane %v485, 2
        %v487 = vadd.f32 %v485, %v486
        %v488 = vrot.slane %v487, 1
        %v489 = vadd.f32 %v487, %v488
        %s490 = vtos %v489
        %v491 = vlaneseq
        %v492 = vshrl.u32 %v491, 7
        %vm493 = vcmp.eq.s32.totalorder %v492, 0
        %vm494 = vcmp.eq.s32.totalorder %v492, 1
        %v495 = vstv %s490
        %v496 = vsel %vm494, %v495, 0.0
        %v497 = vstv %s252
        %v498 = vsel %vm493, %v497, %v496
        %499 = vst [vmem:[%s203] sm:$0xff] %v498
        %s500 = sand.u32 %s82, 1
        %s501 = scalar_lea.sflag [#allocation4], %s500
        %s502 = sand.u32 %s82, 1
        %s503 = smul.addr %s502, 8
        %s504 = scalar_lea.vmem [#allocation7], %s503
        // Predicated region
        $region37: #{tpu_custom_call.1} parent=27 // pred_check
          %p505 = pneg %p92
        $region38: #{tpu_custom_call.1} parent=27 // pred_check_branch
          %507 = sbr.rel (%p505) target = $region40
        $region39: #{tpu_custom_call.1} parent=27 // pred_region
          %s509 = ssub.s32 128, 128
          %510 = vsyncadd %s501, %s509
          %s511 = smul.addr %s22, 128
          %s512 = scalar_lea.hbm %s2, %s511
          %s514 = sshll.u32 %s504, 4
          %s515 = int_to_ptr.vmem [resolvable:$true] %s514
          %517 = dma.vmem_to_hbm [thread:$0]  %s515, 128, %s512, %s501
        $region40: #{tpu_custom_call.1} parent=27 // pred_fallthru
          _
      $region28: #{tpu_custom_call.1} parent=5 // pred_fallthru
        _
      %p518 = scmp.le.s32.totalorder 2, %s17
      // Predicated region
      $region41: #{tpu_custom_call.1} parent=5 // pred_check
        %p519 = pneg %p518
      $region42: #{tpu_custom_call.1} parent=5 // pred_check_branch
        %521 = sbr.rel (%p519) target = $region44
      $region43: #{tpu_custom_call.1} parent=5 // pred_region
        %s522 = ssub.s32 %s17, 2
        // Predicated region
        $region45: #{tpu_custom_call.1} parent=43 // pred_check
          %p523 = pneg %p98
        $region46: #{tpu_custom_call.1} parent=43 // pred_check_branch
          %525 = sbr.rel (%p523) target = $region48
        $region47: #{tpu_custom_call.1} parent=43 // pred_region
          %s526 = sand.u32 %s83, 1
          %s527 = scalar_lea.sflag [#allocation4], %s526
          %s528 = sand.u32 %s83, 1
          %s529 = smul.addr %s528, 8
          %s530 = scalar_lea.vmem [#allocation7], %s529
          %531 = dma.done %s527, 128
        $region48: #{tpu_custom_call.1} parent=43 // pred_fallthru
          _
      $region44: #{tpu_custom_call.1} parent=5 // pred_fallthru
        _
    $region6: #{tpu_custom_call.1} parent=1 // loop_footer
      %s21 = sadd.s32 1, %s17
    $region7: #{tpu_custom_call.1} parent=1 // loop_footer_branch
      %16 = sbr.rel target = $region3
    $region8: #{tpu_custom_call.1} parent=1 // loop_exit
      _
    %532 = vsyncpa [#allocation3], 1
    %s533 = scalar_lea.sflag [#allocation3], 1
    %534 = vsyncpa %s533, 1
    %535 = vsyncpa [#allocation6], 1
    %s536 = scalar_lea.sflag [#allocation6], 1
    %537 = vsyncpa %s536, 1
    %538 = vsyncpa [#allocation4], 1
    %s539 = scalar_lea.sflag [#allocation4], 1
    %540 = vsyncpa %s539, 1

</llo_original>
